<compile_context>
chip_gen: v7x
topology: tpu7x:2x2x1
jax: 0.10.0
libtpu: 0.0.40
codegen_flags: <defaults>
</compile_context>

<pallas_src>
import functools

import jax
import jax.numpy as jnp
from jax.experimental import pallas as pl
from jax.experimental.pallas import tpu as pltpu

EPS = 1e-5
# MXU operand dtype for the conv matmuls (accumulation stays f32).  Set to
# jnp.float32 to recover bit-closer-to-reference numerics at ~3-6x more MXU
# cycles per conv.
CONV_OPERAND_DTYPE = jnp.bfloat16


def _resblock_kernel(x_ref, w1_ref, w2_ref, g1_ref, be1_ref, g2_ref, be2_ref,
                     o_ref, *, chan, inv_count):
    H, L = x_ref.shape
    zrow = jnp.zeros((1, L), dtype=jnp.float32)

    def conv3x3(y, w_ref):
        # One fused MXU matmul per conv: K = 3L chains the three vertical taps
        # inside the MXU accumulation path.  The +-1-row shifted views are
        # built in-register (value-level sublane shift with a zeroed border
        # row, handled by the otherwise idle XLU) -- no padded VMEM scratch,
        # no slab copies, no masked sublane stores.
        up = jnp.concatenate([zrow, y[:H - 1, :]], axis=0)   # y[h-1], 0 at h=0
        dn = jnp.concatenate([y[1:, :], zrow], axis=0)       # y[h+1], 0 at h=H-1
        lhs = jnp.concatenate([up, y, dn], axis=1)           # (H, 3L), 128-aligned
        return jnp.dot(lhs.astype(CONV_OPERAND_DTYPE), w_ref[...],
                       preferred_element_type=jnp.float32)

    def batchnorm(y, g_row, be_row):
        # Train-mode BN (biased variance) folded into one scale/shift.
        # Per-channel stats over (n, h, w): sublane reduce (XLU) to (1, L),
        # then a cyclic lane butterfly -- lanes are packed (n, w, c), so rolls
        # by multiples of `chan` stay inside one channel, and log2(N*W)
        # roll+add steps leave every lane holding its channel's full sum.
        # This keeps the tiny reduction completely off the MXU critical path.
        s1 = jnp.sum(y, axis=0, keepdims=True)          # (1, L)
        s2 = jnp.sum(y * y, axis=0, keepdims=True)      # (1, L)
        step = chan
        while step < L:                                  # unrolled at trace time
            s1 = s1 + pltpu.roll(s1, step, 1)
            s2 = s2 + pltpu.roll(s2, step, 1)
            step *= 2
        mean = s1 * inv_count
        # Single-pass variance (E[y^2] - mean^2): adequate for conv outputs
        # whose mean is O(std); switch to the centered form if |mean| >> std.
        var = s2 * inv_count - mean * mean
        scale = g_row * jax.lax.rsqrt(var + EPS)         # rsqrt -> EUP slot
        return y * scale + (be_row - mean * scale)

    x = x_ref[...]

    # ---- Conv1 -> BN1 -> ReLU -------------------------------------------
    y = conv3x3(x, w1_ref)
    y = jnp.maximum(batchnorm(y, g1_ref[...], be1_ref[...]), 0.0)

    # ---- Conv2 -> BN2 ----------------------------------------------------
    # TODO(synk): pre-stage w2_ref onto the MXU (pltpu.matmul_push_rhs) while
    # BN1/ReLU executes, to hide its weight load on the strictly serial chain.
    y = conv3x3(y, w2_ref)
    y = batchnorm(y, g2_ref[...], be2_ref[...])

    # ---- Residual add (lane-dense (H, L) unmasked store) -----------------
    o_ref[...] = x + y


def _build_tap_mats(w_oihw, n_batch, width, chan):
    """Per-dy (L, L) tap matrices, L = n_batch * width * chan.

    mats[dy, (n, w_in, ci), (n', w_out, co)] =
        w[co, ci, dy, w_in - w_out + 1]  if n == n' and |w_in - w_out| <= 1
        0                                 otherwise
    Horizontal taps and width zero-padding are folded into a block-diagonal
    (over n), tridiagonal (over w) matrix, so the whole conv becomes a single
    lane-dense MXU matmul in the kernel (K = 3L after stacking the dy planes).
    """
    L = n_batch * width * chan
    idx = jnp.arange(L)
    n_i = idx // (width * chan)
    w_i = (idx // chan) % width
    c_i = idx % chan

    dx = w_i[:, None] - w_i[None, :] + 1
    valid = (n_i[:, None] == n_i[None, :]) & (dx >= 0) & (dx <= 2)
    dx_c = jnp.clip(dx, 0, 2)

    w_t = jnp.transpose(w_oihw, (2, 3, 1, 0)).astype(jnp.float32)  # [dy,dx,ci,co]
    ci_mat = jnp.broadcast_to(c_i[:, None], (L, L))
    co_mat = jnp.broadcast_to(c_i[None, :], (L, L))
    mats = w_t[:, dx_c, ci_mat, co_mat]                            # (3, L, L)
    return jnp.where(valid[None, :, :], mats, 0.0)


def make_block_params(w1, b1, g1, be1, w2, b2, g2, be2, *, n_batch, width):
    """Precompute kernel-side parameters (hoisted out of the per-step path).

    Conv weights w*: (C, C, 3, 3).  b1/b2 are accepted for parity with the
    PyTorch module but are mathematically inert under train-mode BatchNorm
    (the mean subtraction cancels them exactly).
    """
    del b1, b2
    chan = w1.shape[0]
    L = n_batch * width * chan
    assert L % 128 == 0, "packed lane width N*W*C must be a multiple of 128"
    nw = n_batch * width
    assert nw & (nw - 1) == 0, "N*W must be a power of two for the BN lane butterfly"

    taps1 = _build_tap_mats(w1, n_batch, width, chan).reshape(3 * L, L)
    taps2 = _build_tap_mats(w2, n_batch, width, chan).reshape(3 * L, L)
    taps1 = taps1.astype(CONV_OPERAND_DTYPE)
    taps2 = taps2.astype(CONV_OPERAND_DTYPE)

    c_idx = jnp.arange(L) % chan
    row = lambda v: v.astype(jnp.float32)[c_idx].reshape(1, L)
    return (taps1, taps2, row(g1), row(be1), row(g2), row(be2))


@jax.jit
def residual_block(x_nchw, params):
    """x_nchw: (N, C, H, W) f32.  params: output of make_block_params."""
    taps1, taps2, g1r, be1r, g2r, be2r = params
    N, C, H, W = x_nchw.shape
    L = N * W * C

    # Pack to (H, (n, w, c)).
    # TODO(synk): when chaining several ResidualBlocks, keep activations in
    # this packed layout between blocks instead of re-packing per call.
    x_pack = jnp.transpose(x_nchw.astype(jnp.float32),
                           (2, 0, 3, 1)).reshape(H, L)

    kernel = functools.partial(_resblock_kernel,
                               chan=C, inv_count=1.0 / float(N * H * W))
    vmem = pl.BlockSpec(memory_space=pltpu.MemorySpace.VMEM)
    # TODO(synk): on v7x, shard a grid over independent blocks/images across
    # the two TensorCores (dimension_semantics=("parallel",)); the batch axis
    # itself cannot be gridded naively because BN statistics couple the batch.
    out_pack = pl.pallas_call(
        kernel,
        out_shape=jax.ShapeDtypeStruct((H, L), jnp.float32),
        in_specs=[vmem] * 7,
        out_specs=vmem,
    )(x_pack, taps1, taps2, g1r, be1r, g2r, be2r)

    return jnp.transpose(out_pack.reshape(H, N, W, C), (1, 3, 0, 2))


def _reference(x, w1, b1, g1, be1, w2, b2, g2, be2):
    """Pure-JAX NCHW f32 reference (train-mode BatchNorm, biases included)."""
    def conv(x, w, b):
        y = jax.lax.conv_general_dilated(
            x, w, window_strides=(1, 1), padding=((1, 1), (1, 1)),
            dimension_numbers=("NCHW", "OIHW", "NCHW"))
        return y + b[None, :, None, None]

    def bn(y, g, be):
        mean = y.mean(axis=(0, 2, 3), keepdims=True)
        var = ((y - mean) ** 2).mean(axis=(0, 2, 3), keepdims=True)
        return ((y - mean) / jnp.sqrt(var + EPS)) * g[None, :, None, None] \
            + be[None, :, None, None]

    y = jnp.maximum(bn(conv(x, w1, b1), g1, be1), 0.0)
    y = bn(conv(y, w2, b2), g2, be2)
    return x + y


if __name__ == "__main__":
    N, C, H, W = 2, 4, 16, 16  # num_filts = 4

    key = jax.random.PRNGKey(0)
    kx, k1, k2, k3, k4, k5, k6, k7, k8 = jax.random.split(key, 9)

    x = jax.random.normal(kx, (N, C, H, W), dtype=jnp.float32)

    # Deterministic synthetic parameters (shapes per nn.Conv2d / nn.BatchNorm2d).
    w1 = 0.2 * jax.random.normal(k1, (C, C, 3, 3), dtype=jnp.float32)
    b1 = 0.1 * jax.random.normal(k2, (C,), dtype=jnp.float32)
    g1 = 1.0 + 0.1 * jax.random.normal(k3, (C,), dtype=jnp.float32)
    be1 = 0.1 * jax.random.normal(k4, (C,), dtype=jnp.float32)
    w2 = 0.2 * jax.random.normal(k5, (C, C, 3, 3), dtype=jnp.float32)
    b2 = 0.1 * jax.random.normal(k6, (C,), dtype=jnp.float32)
    g2 = 1.0 + 0.1 * jax.random.normal(k7, (C,), dtype=jnp.float32)
    be2 = 0.1 * jax.random.normal(k8, (C,), dtype=jnp.float32)

    # Tap matrices / lane rows are built once per set of weights (hoisted out
    # of the per-step path), then the jitted packed forward is applied.
    params = make_block_params(w1, b1, g1, be1, w2, b2, g2, be2,
                               n_batch=N, width=W)
    out = residual_block(x, params)
    out = jax.block_until_ready(out)

    ref = _reference(x, w1, b1, g1, be1, w2, b2, g2, be2)
    assert out.shape == (N, C, H, W)
    # Tolerance vs the f32 reference reflects bf16 MXU operand rounding through
    # two convs (f32 accumulation): expected deviations are ~1e-2-scale on these
    # unit-scale activations; structural bugs would be orders of magnitude larger.
    max_err = float(jnp.max(jnp.abs(out - ref)))
    assert jnp.allclose(out, ref, rtol=1e-2, atol=5e-2), max_err

    print("KERNEL_OK")
</pallas_src>

<mosaic_0001>
module attributes {stable_mosaic.version = 11 : i64} {
  func.func @_resblock_kernel(%arg0: memref<16x128xf32, #tpu.memory_space<vmem>>, %arg1: memref<384x128xbf16, #tpu.memory_space<vmem>>, %arg2: memref<384x128xbf16, #tpu.memory_space<vmem>>, %arg3: memref<1x128xf32, #tpu.memory_space<vmem>>, %arg4: memref<1x128xf32, #tpu.memory_space<vmem>>, %arg5: memref<1x128xf32, #tpu.memory_space<vmem>>, %arg6: memref<1x128xf32, #tpu.memory_space<vmem>>, %arg7: memref<16x128xf32, #tpu.memory_space<vmem>>) attributes {dimension_semantics = [], scalar_prefetch = 0 : i64, scratch_operands = 0 : i64, tpu.core_type = #tpu.core_type<tc>} {
    %cst = arith.constant 0.000000e+00 : f32
    %0 = vector.broadcast %cst : f32 to vector<1x128xf32>
    %c0 = arith.constant 0 : index
    %c0_0 = arith.constant 0 : index
    %1 = vector.load %arg0[%c0, %c0_0] : memref<16x128xf32, #tpu.memory_space<vmem>>, vector<16x128xf32>
    %2 = vector.extract_strided_slice %1 {offsets = [0, 0], sizes = [15, 128], strides = [1, 1]} : vector<16x128xf32> to vector<15x128xf32>
    %3 = tpu.concatenate %0, %2 in 0 : vector<1x128xf32>, vector<15x128xf32> -> vector<16x128xf32>
    %4 = vector.extract_strided_slice %1 {offsets = [1, 0], sizes = [15, 128], strides = [1, 1]} : vector<16x128xf32> to vector<15x128xf32>
    %5 = tpu.concatenate %4, %0 in 0 : vector<15x128xf32>, vector<1x128xf32> -> vector<16x128xf32>
    %6 = tpu.concatenate %3, %1, %5 in 1 : vector<16x128xf32>, vector<16x128xf32>, vector<16x128xf32> -> vector<16x384xf32>
    %7 = arith.truncf %6 : vector<16x384xf32> to vector<16x384xbf16>
    %c0_1 = arith.constant 0 : index
    %c0_2 = arith.constant 0 : index
    %8 = vector.load %arg1[%c0_1, %c0_2] : memref<384x128xbf16, #tpu.memory_space<vmem>>, vector<384x128xbf16>
    %cst_3 = arith.constant dense<0.000000e+00> : vector<16x128xf32>
    %9 = tpu.matmul %7, %8, %cst_3 {dimension_numbers = #tpu.dot_dimension_numbers<[1], [0], [0], [1], [0, 0, 1, 1], [], []>} : vector<16x384xbf16>, vector<384x128xbf16>, vector<16x128xf32> -> vector<16x128xf32>
    %c0_4 = arith.constant 0 : index
    %c0_5 = arith.constant 0 : index
    %10 = vector.load %arg3[%c0_4, %c0_5] : memref<1x128xf32, #tpu.memory_space<vmem>>, vector<1x128xf32>
    %c0_6 = arith.constant 0 : index
    %c0_7 = arith.constant 0 : index
    %11 = vector.load %arg4[%c0_6, %c0_7] : memref<1x128xf32, #tpu.memory_space<vmem>>, vector<1x128xf32>
    %cst_8 = arith.constant dense<0.000000e+00> : vector<128xf32>
    %12 = vector.multi_reduction <add>, %9, %cst_8 [0] : vector<16x128xf32> to vector<128xf32>
    %13 = vector.shape_cast %12 : vector<128xf32> to vector<1x128xf32>
    %14 = arith.mulf %9, %9 : vector<16x128xf32>
    %cst_9 = arith.constant dense<0.000000e+00> : vector<128xf32>
    %15 = vector.multi_reduction <add>, %14, %cst_9 [0] : vector<16x128xf32> to vector<128xf32>
    %16 = vector.shape_cast %15 : vector<128xf32> to vector<1x128xf32>
    %c4_i32 = arith.constant 4 : i32
    %17 = tpu.dynamic_rotate %13 by %c4_i32 dim 1 : vector<1x128xf32>, i32 -> vector<1x128xf32>
    %18 = arith.addf %13, %17 : vector<1x128xf32>
    %c4_i32_10 = arith.constant 4 : i32
    %19 = tpu.dynamic_rotate %16 by %c4_i32_10 dim 1 : vector<1x128xf32>, i32 -> vector<1x128xf32>
    %20 = arith.addf %16, %19 : vector<1x128xf32>
    %c8_i32 = arith.constant 8 : i32
    %21 = tpu.dynamic_rotate %18 by %c8_i32 dim 1 : vector<1x128xf32>, i32 -> vector<1x128xf32>
    %22 = arith.addf %18, %21 : vector<1x128xf32>
    %c8_i32_11 = arith.constant 8 : i32
    %23 = tpu.dynamic_rotate %20 by %c8_i32_11 dim 1 : vector<1x128xf32>, i32 -> vector<1x128xf32>
    %24 = arith.addf %20, %23 : vector<1x128xf32>
    %c16_i32 = arith.constant 16 : i32
    %25 = tpu.dynamic_rotate %22 by %c16_i32 dim 1 : vector<1x128xf32>, i32 -> vector<1x128xf32>
    %26 = arith.addf %22, %25 : vector<1x128xf32>
    %c16_i32_12 = arith.constant 16 : i32
    %27 = tpu.dynamic_rotate %24 by %c16_i32_12 dim 1 : vector<1x128xf32>, i32 -> vector<1x128xf32>
    %28 = arith.addf %24, %27 : vector<1x128xf32>
    %c32_i32 = arith.constant 32 : i32
    %29 = tpu.dynamic_rotate %26 by %c32_i32 dim 1 : vector<1x128xf32>, i32 -> vector<1x128xf32>
    %30 = arith.addf %26, %29 : vector<1x128xf32>
    %c32_i32_13 = arith.constant 32 : i32
    %31 = tpu.dynamic_rotate %28 by %c32_i32_13 dim 1 : vector<1x128xf32>, i32 -> vector<1x128xf32>
    %32 = arith.addf %28, %31 : vector<1x128xf32>
    %c64_i32 = arith.constant 64 : i32
    %33 = tpu.dynamic_rotate %30 by %c64_i32 dim 1 : vector<1x128xf32>, i32 -> vector<1x128xf32>
    %34 = arith.addf %30, %33 : vector<1x128xf32>
    %c64_i32_14 = arith.constant 64 : i32
    %35 = tpu.dynamic_rotate %32 by %c64_i32_14 dim 1 : vector<1x128xf32>, i32 -> vector<1x128xf32>
    %36 = arith.addf %32, %35 : vector<1x128xf32>
    %cst_15 = arith.constant 0.001953125 : f32
    %37 = vector.broadcast %cst_15 : f32 to vector<1x128xf32>
    %38 = arith.mulf %34, %37 : vector<1x128xf32>
    %cst_16 = arith.constant 0.001953125 : f32
    %39 = vector.broadcast %cst_16 : f32 to vector<1x128xf32>
    %40 = arith.mulf %36, %39 : vector<1x128xf32>
    %41 = arith.mulf %38, %38 : vector<1x128xf32>
    %42 = arith.subf %40, %41 : vector<1x128xf32>
    %cst_17 = arith.constant 9.99999974E-6 : f32
    %43 = vector.broadcast %cst_17 : f32 to vector<1x128xf32>
    %44 = arith.addf %42, %43 : vector<1x128xf32>
    %45 = math.rsqrt %44 : vector<1x128xf32>
    %46 = arith.mulf %10, %45 : vector<1x128xf32>
    %47 = vector.broadcast %46 : vector<1x128xf32> to vector<16x128xf32>
    %48 = arith.mulf %9, %47 : vector<16x128xf32>
    %49 = arith.mulf %38, %46 : vector<1x128xf32>
    %50 = arith.subf %11, %49 : vector<1x128xf32>
    %51 = vector.broadcast %50 : vector<1x128xf32> to vector<16x128xf32>
    %52 = arith.addf %48, %51 : vector<16x128xf32>
    %cst_18 = arith.constant 0.000000e+00 : f32
    %53 = vector.broadcast %cst_18 : f32 to vector<16x128xf32>
    %54 = arith.maximumf %52, %53 : vector<16x128xf32>
    %55 = vector.extract_strided_slice %54 {offsets = [0, 0], sizes = [15, 128], strides = [1, 1]} : vector<16x128xf32> to vector<15x128xf32>
    %56 = tpu.concatenate %0, %55 in 0 : vector<1x128xf32>, vector<15x128xf32> -> vector<16x128xf32>
    %57 = vector.extract_strided_slice %54 {offsets = [1, 0], sizes = [15, 128], strides = [1, 1]} : vector<16x128xf32> to vector<15x128xf32>
    %58 = tpu.concatenate %57, %0 in 0 : vector<15x128xf32>, vector<1x128xf32> -> vector<16x128xf32>
    %59 = tpu.concatenate %56, %54, %58 in 1 : vector<16x128xf32>, vector<16x128xf32>, vector<16x128xf32> -> vector<16x384xf32>
    %60 = arith.truncf %59 : vector<16x384xf32> to vector<16x384xbf16>
    %c0_19 = arith.constant 0 : index
    %c0_20 = arith.constant 0 : index
    %61 = vector.load %arg2[%c0_19, %c0_20] : memref<384x128xbf16, #tpu.memory_space<vmem>>, vector<384x128xbf16>
    %cst_21 = arith.constant dense<0.000000e+00> : vector<16x128xf32>
    %62 = tpu.matmul %60, %61, %cst_21 {dimension_numbers = #tpu.dot_dimension_numbers<[1], [0], [0], [1], [0, 0, 1, 1], [], []>} : vector<16x384xbf16>, vector<384x128xbf16>, vector<16x128xf32> -> vector<16x128xf32>
    %c0_22 = arith.constant 0 : index
    %c0_23 = arith.constant 0 : index
    %63 = vector.load %arg5[%c0_22, %c0_23] : memref<1x128xf32, #tpu.memory_space<vmem>>, vector<1x128xf32>
    %c0_24 = arith.constant 0 : index
    %c0_25 = arith.constant 0 : index
    %64 = vector.load %arg6[%c0_24, %c0_25] : memref<1x128xf32, #tpu.memory_space<vmem>>, vector<1x128xf32>
    %cst_26 = arith.constant dense<0.000000e+00> : vector<128xf32>
    %65 = vector.multi_reduction <add>, %62, %cst_26 [0] : vector<16x128xf32> to vector<128xf32>
    %66 = vector.shape_cast %65 : vector<128xf32> to vector<1x128xf32>
    %67 = arith.mulf %62, %62 : vector<16x128xf32>
    %cst_27 = arith.constant dense<0.000000e+00> : vector<128xf32>
    %68 = vector.multi_reduction <add>, %67, %cst_27 [0] : vector<16x128xf32> to vector<128xf32>
    %69 = vector.shape_cast %68 : vector<128xf32> to vector<1x128xf32>
    %c4_i32_28 = arith.constant 4 : i32
    %70 = tpu.dynamic_rotate %66 by %c4_i32_28 dim 1 : vector<1x128xf32>, i32 -> vector<1x128xf32>
    %71 = arith.addf %66, %70 : vector<1x128xf32>
    %c4_i32_29 = arith.constant 4 : i32
    %72 = tpu.dynamic_rotate %69 by %c4_i32_29 dim 1 : vector<1x128xf32>, i32 -> vector<1x128xf32>
    %73 = arith.addf %69, %72 : vector<1x128xf32>
    %c8_i32_30 = arith.constant 8 : i32
    %74 = tpu.dynamic_rotate %71 by %c8_i32_30 dim 1 : vector<1x128xf32>, i32 -> vector<1x128xf32>
    %75 = arith.addf %71, %74 : vector<1x128xf32>
    %c8_i32_31 = arith.constant 8 : i32
    %76 = tpu.dynamic_rotate %73 by %c8_i32_31 dim 1 : vector<1x128xf32>, i32 -> vector<1x128xf32>
    %77 = arith.addf %73, %76 : vector<1x128xf32>
    %c16_i32_32 = arith.constant 16 : i32
    %78 = tpu.dynamic_rotate %75 by %c16_i32_32 dim 1 : vector<1x128xf32>, i32 -> vector<1x128xf32>
    %79 = arith.addf %75, %78 : vector<1x128xf32>
    %c16_i32_33 = arith.constant 16 : i32
    %80 = tpu.dynamic_rotate %77 by %c16_i32_33 dim 1 : vector<1x128xf32>, i32 -> vector<1x128xf32>
    %81 = arith.addf %77, %80 : vector<1x128xf32>
    %c32_i32_34 = arith.constant 32 : i32
    %82 = tpu.dynamic_rotate %79 by %c32_i32_34 dim 1 : vector<1x128xf32>, i32 -> vector<1x128xf32>
    %83 = arith.addf %79, %82 : vector<1x128xf32>
    %c32_i32_35 = arith.constant 32 : i32
    %84 = tpu.dynamic_rotate %81 by %c32_i32_35 dim 1 : vector<1x128xf32>, i32 -> vector<1x128xf32>
    %85 = arith.addf %81, %84 : vector<1x128xf32>
    %c64_i32_36 = arith.constant 64 : i32
    %86 = tpu.dynamic_rotate %83 by %c64_i32_36 dim 1 : vector<1x128xf32>, i32 -> vector<1x128xf32>
    %87 = arith.addf %83, %86 : vector<1x128xf32>
    %c64_i32_37 = arith.constant 64 : i32
    %88 = tpu.dynamic_rotate %85 by %c64_i32_37 dim 1 : vector<1x128xf32>, i32 -> vector<1x128xf32>
    %89 = arith.addf %85, %88 : vector<1x128xf32>
    %cst_38 = arith.constant 0.001953125 : f32
    %90 = vector.broadcast %cst_38 : f32 to vector<1x128xf32>
    %91 = arith.mulf %87, %90 : vector<1x128xf32>
    %cst_39 = arith.constant 0.001953125 : f32
    %92 = vector.broadcast %cst_39 : f32 to vector<1x128xf32>
    %93 = arith.mulf %89, %92 : vector<1x128xf32>
    %94 = arith.mulf %91, %91 : vector<1x128xf32>
    %95 = arith.subf %93, %94 : vector<1x128xf32>
    %cst_40 = arith.constant 9.99999974E-6 : f32
    %96 = vector.broadcast %cst_40 : f32 to vector<1x128xf32>
    %97 = arith.addf %95, %96 : vector<1x128xf32>
    %98 = math.rsqrt %97 : vector<1x128xf32>
    %99 = arith.mulf %63, %98 : vector<1x128xf32>
    %100 = vector.broadcast %99 : vector<1x128xf32> to vector<16x128xf32>
    %101 = arith.mulf %62, %100 : vector<16x128xf32>
    %102 = arith.mulf %91, %99 : vector<1x128xf32>
    %103 = arith.subf %64, %102 : vector<1x128xf32>
    %104 = vector.broadcast %103 : vector<1x128xf32> to vector<16x128xf32>
    %105 = arith.addf %101, %104 : vector<16x128xf32>
    %106 = arith.addf %1, %105 : vector<16x128xf32>
    %c0_41 = arith.constant 0 : index
    %c0_42 = arith.constant 0 : index
    %107 = vector.load %arg7[%c0_41, %c0_42] : memref<16x128xf32, #tpu.memory_space<vmem>>, vector<16x128xf32>
    tpu.vector_store %arg7[%c0_41, %c0_42], %106 {strides = array<i32>} : memref<16x128xf32, #tpu.memory_space<vmem>>, vector<16x128xf32>,
    return
  }
}

</mosaic_0001>

<llo_original>
// kernel: residual_block.1
$region0: #{residual_block.1}
  #allocation0 [shape = 'u32[]', space=smem, size = 0x4, offset = 0x4, fixed_abs, tag = 'smem constant byte address 0x4 - core index']
  #allocation1 [shape = 'u32[144,128]{1,0:T(1,128)}', space=vmem, size = 0x12000, scoped, tag = 'internal scratch']
  %s0 = inlined_call_operand.vmem [shape: f32[16,128], index: 0, kind: input, shape index: {}]
  %s1 = inlined_call_operand.vmem [shape: bf16[384,128], index: 1, kind: input, shape index: {}]
  %s2 = inlined_call_operand.vmem [shape: bf16[384,128], index: 2, kind: input, shape index: {}]
  %s3 = inlined_call_operand.vmem [shape: f32[1,128], index: 3, kind: input, shape index: {}]
  %s4 = inlined_call_operand.vmem [shape: f32[1,128], index: 4, kind: input, shape index: {}]
  %s5 = inlined_call_operand.vmem [shape: f32[1,128], index: 5, kind: input, shape index: {}]
  %s6 = inlined_call_operand.vmem [shape: f32[1,128], index: 6, kind: input, shape index: {}]
  %s7 = inlined_call_operand.vmem [shape: f32[16,128], index: 7, kind: output, shape index: {}]
  %s8 = sld [smem:[#allocation0]]
  $region38: #{residual_block.1} parent=0
    _
  %s10 = ssub.s32 1, %s8
  %s11 = scalar_select 0, %s10, %s8
  // Predicated region
  $region2: #{residual_block.1} parent=0 // pred_check
    _
  $region3: #{residual_block.1} parent=0 // pred_check_branch
    %13 = sbr.rel (0) target = $region5
  $region4: #{residual_block.1} parent=0 // pred_region
    _
  $region5: #{residual_block.1} parent=0 // pred_fallthru
    _
  // Predicated region
  $region6: #{residual_block.1} parent=0 // pred_check
    _
  $region7: #{residual_block.1} parent=0 // pred_check_branch
    %15 = sbr.rel (0) target = $region9
  $region8: #{residual_block.1} parent=0 // pred_region
    _
  $region9: #{residual_block.1} parent=0 // pred_fallthru
    _
  // Predicated region
  $region10: #{residual_block.1} parent=0 // pred_check
    _
  $region11: #{residual_block.1} parent=0 // pred_check_branch
    %17 = sbr.rel (0) target = $region13
  $region12: #{residual_block.1} parent=0 // pred_region
    _
  $region13: #{residual_block.1} parent=0 // pred_fallthru
    _
  // Predicated region
  $region14: #{residual_block.1} parent=0 // pred_check
    _
  $region15: #{residual_block.1} parent=0 // pred_check_branch
    %19 = sbr.rel (0) target = $region17
  $region16: #{residual_block.1} parent=0 // pred_region
    _
  $region17: #{residual_block.1} parent=0 // pred_fallthru
    _
  // Predicated region
  $region18: #{residual_block.1} parent=0 // pred_check
    _
  $region19: #{residual_block.1} parent=0 // pred_check_branch
    %21 = sbr.rel (0) target = $region21
  $region20: #{residual_block.1} parent=0 // pred_region
    _
  $region21: #{residual_block.1} parent=0 // pred_fallthru
    _
  // Predicated region
  $region22: #{residual_block.1} parent=0 // pred_check
    _
  $region23: #{residual_block.1} parent=0 // pred_check_branch
    %23 = sbr.rel (0) target = $region25
  $region24: #{residual_block.1} parent=0 // pred_region
    _
  $region25: #{residual_block.1} parent=0 // pred_fallthru
    _
  // Predicated region
  $region26: #{residual_block.1} parent=0 // pred_check
    _
  $region27: #{residual_block.1} parent=0 // pred_check_branch
    %25 = sbr.rel (0) target = $region29
  $region28: #{residual_block.1} parent=0 // pred_region
    _
  $region29: #{residual_block.1} parent=0 // pred_fallthru
    _
  %v27 = vld [vmem:[%s0] sm:$0xff]
  %v28 = vld [vmem:[%s0 + $0x8] sm:$0xff]
  %vm31 = vcmask 1040384
  %v32 = vrot.slane %v27, 7
  %v33 = vrot.slane %v28, 7
  %v34 = vsel %vm31, %v32, %v33
  %v37 = vsel %vm31, 0.0, %v32
  %vm38 = vcmask 1046528
  %v39 = vrot.slane %v27, 1
  %v40 = vrot.slane %v28, 1
  %v41 = vsel %vm38, %v39, %v40
  %v44 = vsel %vm38, %v40, 0.0
  %v45 = vpack.c.bf16 %v34, %v37
  %v46 = vpack.c.bf16 %v28, %v27
  %v47 = vpack.c.bf16 %v44, %v41
  %v48 = vld [vmem:[%s1] sm:$0xf]
  %v49 = vld [vmem:[%s1 + $0x4] sm:$0xf]
  %v50 = vld [vmem:[%s1 + $0x8] sm:$0xf]
  %v51 = vld [vmem:[%s1 + $0xc] sm:$0xf]
  %v52 = vld [vmem:[%s1 + $0x10] sm:$0xf]
  %v53 = vld [vmem:[%s1 + $0x14] sm:$0xf]
  %v54 = vld [vmem:[%s1 + $0x18] sm:$0xf]
  %v55 = vld [vmem:[%s1 + $0x1c] sm:$0xf]
  %v56 = vld [vmem:[%s1 + $0x20] sm:$0xf]
  %v57 = vld [vmem:[%s1 + $0x24] sm:$0xf]
  %v58 = vld [vmem:[%s1 + $0x28] sm:$0xf]
  %v59 = vld [vmem:[%s1 + $0x2c] sm:$0xf]
  %v60 = vld [vmem:[%s1 + $0x30] sm:$0xf]
  %v61 = vld [vmem:[%s1 + $0x34] sm:$0xf]
  %v62 = vld [vmem:[%s1 + $0x38] sm:$0xf]
  %v63 = vld [vmem:[%s1 + $0x3c] sm:$0xf]
  %v64 = vld [vmem:[%s1 + $0x40] sm:$0xf]
  %v65 = vld [vmem:[%s1 + $0x44] sm:$0xf]
  %v66 = vld [vmem:[%s1 + $0x48] sm:$0xf]
  %v67 = vld [vmem:[%s1 + $0x4c] sm:$0xf]
  %v68 = vld [vmem:[%s1 + $0x50] sm:$0xf]
  %v69 = vld [vmem:[%s1 + $0x54] sm:$0xf]
  %v70 = vld [vmem:[%s1 + $0x58] sm:$0xf]
  %v71 = vld [vmem:[%s1 + $0x5c] sm:$0xf]
  %v72 = vld [vmem:[%s1 + $0x60] sm:$0xf]
  %v73 = vld [vmem:[%s1 + $0x64] sm:$0xf]
  %v74 = vld [vmem:[%s1 + $0x68] sm:$0xf]
  %v75 = vld [vmem:[%s1 + $0x6c] sm:$0xf]
  %v76 = vld [vmem:[%s1 + $0x70] sm:$0xf]
  %v77 = vld [vmem:[%s1 + $0x74] sm:$0xf]
  %v78 = vld [vmem:[%s1 + $0x78] sm:$0xf]
  %v79 = vld [vmem:[%s1 + $0x7c] sm:$0xf]
  %v80 = vld [vmem:[%s1 + $0x80] sm:$0xf]
  %v81 = vld [vmem:[%s1 + $0x84] sm:$0xf]
  %v82 = vld [vmem:[%s1 + $0x88] sm:$0xf]
  %v83 = vld [vmem:[%s1 + $0x8c] sm:$0xf]
  %v84 = vld [vmem:[%s1 + $0x90] sm:$0xf]
  %v85 = vld [vmem:[%s1 + $0x94] sm:$0xf]
  %v86 = vld [vmem:[%s1 + $0x98] sm:$0xf]
  %v87 = vld [vmem:[%s1 + $0x9c] sm:$0xf]
  %v88 = vld [vmem:[%s1 + $0xa0] sm:$0xf]
  %v89 = vld [vmem:[%s1 + $0xa4] sm:$0xf]
  %v90 = vld [vmem:[%s1 + $0xa8] sm:$0xf]
  %v91 = vld [vmem:[%s1 + $0xac] sm:$0xf]
  %v92 = vld [vmem:[%s1 + $0xb0] sm:$0xf]
  %v93 = vld [vmem:[%s1 + $0xb4] sm:$0xf]
  %v94 = vld [vmem:[%s1 + $0xb8] sm:$0xf]
  %v95 = vld [vmem:[%s1 + $0xbc] sm:$0xf]
  %v144 = vunpack.c.l.b16 %v48
  %v145 = vunpack.c.l.b16 %v49
  %v146 = vunpack.c.l.b16 %v50
  %v147 = vunpack.c.l.b16 %v51
  %v148 = vunpack.c.l.b16 %v52
  %v149 = vunpack.c.l.b16 %v53
  %v150 = vunpack.c.l.b16 %v54
  %v151 = vunpack.c.l.b16 %v55
  %v152 = vunpack.c.l.b16 %v56
  %v153 = vunpack.c.l.b16 %v57
  %v154 = vunpack.c.l.b16 %v58
  %v155 = vunpack.c.l.b16 %v59
  %v156 = vunpack.c.l.b16 %v60
  %v157 = vunpack.c.l.b16 %v61
  %v158 = vunpack.c.l.b16 %v62
  %v159 = vunpack.c.l.b16 %v63
  %v160 = vunpack.c.l.b16 %v64
  %v161 = vunpack.c.l.b16 %v65
  %v162 = vunpack.c.l.b16 %v66
  %v163 = vunpack.c.l.b16 %v67
  %v164 = vunpack.c.l.b16 %v68
  %v165 = vunpack.c.l.b16 %v69
  %v166 = vunpack.c.l.b16 %v70
  %v167 = vunpack.c.l.b16 %v71
  %v168 = vunpack.c.l.b16 %v72
  %v169 = vunpack.c.l.b16 %v73
  %v170 = vunpack.c.l.b16 %v74
  %v171 = vunpack.c.l.b16 %v75
  %v172 = vunpack.c.l.b16 %v76
  %v173 = vunpack.c.l.b16 %v77
  %v174 = vunpack.c.l.b16 %v78
  %v175 = vunpack.c.l.b16 %v79
  %v176 = vunpack.c.l.b16 %v80
  %v177 = vunpack.c.l.b16 %v81
  %v178 = vunpack.c.l.b16 %v82
  %v179 = vunpack.c.l.b16 %v83
  %v180 = vunpack.c.l.b16 %v84
  %v181 = vunpack.c.l.b16 %v85
  %v182 = vunpack.c.l.b16 %v86
  %v183 = vunpack.c.l.b16 %v87
  %v184 = vunpack.c.l.b16 %v88
  %v185 = vunpack.c.l.b16 %v89
  %v186 = vunpack.c.l.b16 %v90
  %v187 = vunpack.c.l.b16 %v91
  %v188 = vunpack.c.l.b16 %v92
  %v189 = vunpack.c.l.b16 %v93
  %v190 = vunpack.c.l.b16 %v94
  %v191 = vunpack.c.l.b16 %v95
  %v192 = vpack.c.b16 %v145, %v144
  %v193 = vpack.c.b16 %v147, %v146
  %v194 = vpack.c.b16 %v149, %v148
  %v195 = vpack.c.b16 %v151, %v150
  %v196 = vpack.c.b16 %v153, %v152
  %v197 = vpack.c.b16 %v155, %v154
  %v198 = vpack.c.b16 %v157, %v156
  %v199 = vpack.c.b16 %v159, %v158
  %v200 = vpack.c.b16 %v161, %v160
  %v201 = vpack.c.b16 %v163, %v162
  %v202 = vpack.c.b16 %v165, %v164
  %v203 = vpack.c.b16 %v167, %v166
  %v204 = vpack.c.b16 %v169, %v168
  %v205 = vpack.c.b16 %v171, %v170
  %v206 = vpack.c.b16 %v173, %v172
  %v207 = vpack.c.b16 %v175, %v174
  %v208 = vpack.c.b16 %v177, %v176
  %v209 = vpack.c.b16 %v179, %v178
  %v210 = vpack.c.b16 %v181, %v180
  %v211 = vpack.c.b16 %v183, %v182
  %v212 = vpack.c.b16 %v185, %v184
  %v213 = vpack.c.b16 %v187, %v186
  %v214 = vpack.c.b16 %v189, %v188
  %v215 = vpack.c.b16 %v191, %v190
  %240 = vmatprep.subr.bf16.mxu0 0
  %241 = vmatpush1.bf16.msra.mxu0 %v192
  %242 = vmatprep.subr.bf16.mxu0 0
  %243 = vmatpush1.bf16.msra.mxu0 %v193
  %244 = vmatprep.subr.bf16.mxu0 0
  %245 = vmatpush1.bf16.msra.mxu0 %v194
  %246 = vmatprep.subr.bf16.mxu0 0
  %247 = vmatpush1.bf16.msra.mxu0 %v195
  %248 = vmatprep.subr.bf16.mxu0 0
  %249 = vmatpush1.bf16.msra.mxu0 %v196
  %250 = vmatprep.subr.bf16.mxu0 0
  %251 = vmatpush1.bf16.msra.mxu0 %v197
  %252 = vmatprep.subr.bf16.mxu0 0
  %253 = vmatpush1.bf16.msra.mxu0 %v198
  %254 = vmatprep.subr.bf16.mxu0 0
  %255 = vmatpush1.bf16.msra.mxu0 %v199
  %256 = vmatprep.subr.bf16.mxu0 0
  %257 = vmatpush1.bf16.msra.mxu0 %v200
  %258 = vmatprep.subr.bf16.mxu0 0
  %259 = vmatpush1.bf16.msra.mxu0 %v201
  %260 = vmatprep.subr.bf16.mxu0 0
  %261 = vmatpush1.bf16.msra.mxu0 %v202
  %262 = vmatprep.subr.bf16.mxu0 0
  %263 = vmatpush1.bf16.msra.mxu0 %v203
  %264 = vmatprep.subr.bf16.mxu0 0
  %265 = vmatpush1.bf16.msra.mxu0 %v204
  %266 = vmatprep.subr.bf16.mxu0 0
  %267 = vmatpush1.bf16.msra.mxu0 %v205
  %268 = vmatprep.subr.bf16.mxu0 0
  %269 = vmatpush1.bf16.msra.mxu0 %v206
  %270 = vmatprep.subr.bf16.mxu0 0
  %271 = vmatpush1.bf16.msra.mxu0 %v207
  %272 = vmatprep.mubr.bf16.mxu0 %v46
  %273 = vmatmul.mubr.bf16.gmra.mrb[0].mxu0 %v45
  %v274 = vpop.f32.mrb[0].mxu0
  %v275 = vadd.f32 0.0, %v274
  %v276 = vpop.f32.mrb[0].mxu0
  %v277 = vpop.f32.mrb[0].mxu0
  %v278 = vadd.f32 0.0, %v277
  %v279 = vpop.f32.mrb[0].mxu0
  %280 = vdwg.mxu0
  %281 = vmatprep.subr.bf16.mxu0 0
  %282 = vmatpush1.bf16.msra.mxu0 %v208
  %283 = vmatprep.subr.bf16.mxu0 0
  %284 = vmatpush1.bf16.msra.mxu0 %v209
  %285 = vmatprep.subr.bf16.mxu0 0
  %286 = vmatpush1.bf16.msra.mxu0 %v210
  %287 = vmatprep.subr.bf16.mxu0 0
  %288 = vmatpush1.bf16.msra.mxu0 %v211
  %289 = vmatprep.subr.bf16.mxu0 0
  %290 = vmatpush1.bf16.msra.mxu0 %v212
  %291 = vmatprep.subr.bf16.mxu0 0
  %292 = vmatpush1.bf16.msra.mxu0 %v213
  %293 = vmatprep.subr.bf16.mxu0 0
  %294 = vmatpush1.bf16.msra.mxu0 %v214
  %295 = vmatprep.subr.bf16.mxu0 0
  %296 = vmatpush1.bf16.msra.mxu0 %v215
  %297 = vmatprep.subr.bf16.mxu0 0
  %298 = vmatpush1.bf16.msra.mxu0 0
  %299 = vmatprep.subr.bf16.mxu0 0
  %300 = vmatpush1.bf16.msra.mxu0 0
  %301 = vmatprep.subr.bf16.mxu0 0
  %302 = vmatpush1.bf16.msra.mxu0 0
  %303 = vmatprep.subr.bf16.mxu0 0
  %304 = vmatpush1.bf16.msra.mxu0 0
  %305 = vmatprep.subr.bf16.mxu0 0
  %306 = vmatpush1.bf16.msra.mxu0 0
  %307 = vmatprep.subr.bf16.mxu0 0
  %308 = vmatpush1.bf16.msra.mxu0 0
  %309 = vmatprep.subr.bf16.mxu0 0
  %310 = vmatpush1.bf16.msra.mxu0 0
  %311 = vmatprep.subr.bf16.mxu0 0
  %312 = vmatpush1.bf16.msra.mxu0 0
  %313 = vmatprep.mubr.bf16.mxu0 0
  %314 = vmatmul.mubr.bf16.gmra.mrb[0].mxu0 %v47
  %v315 = vpop.f32.mrb[0].mxu0
  %v316 = vadd.f32 %v275, %v315
  %v317 = vpop.f32.mrb[0].mxu0
  %v318 = vpop.f32.mrb[0].mxu0
  %v319 = vadd.f32 %v278, %v318
  %v320 = vpop.f32.mrb[0].mxu0
  %321 = vdwg.mxu0
  %v322 = vld [vmem:[%s3] sm:$0x1]
  %v323 = vld [vmem:[%s4] sm:$0x1]
  %v324 = vadd.f32 %v316, %v319
  %v325 = vrot.slane %v324, 4
  %v326 = vadd.f32 %v324, %v325
  %v327 = vrot.slane %v326, 2
  %v328 = vadd.f32 %v326, %v327
  %v329 = vrot.slane %v328, 1
  %v330 = vadd.f32 %v328, %v329
  %v331 = vmul.f32 %v316, %v316
  %v332 = vmul.f32 %v319, %v319
  %v333 = vadd.f32 %v331, %v332
  %v334 = vrot.slane %v333, 4
  %v335 = vadd.f32 %v333, %v334
  %v336 = vrot.slane %v335, 2
  %v337 = vadd.f32 %v335, %v336
  %v338 = vrot.slane %v337, 1
  %v339 = vadd.f32 %v337, %v338
  %340 = vrot.lane.b32.xlu0 %v330, 4
  %v341 = vpop.permute.xlu0 %340
  %v342 = vadd.f32 %v330, %v341
  %343 = vrot.lane.b32.xlu0 %v339, 4
  %v344 = vpop.permute.xlu0 %343
  %v345 = vadd.f32 %v339, %v344
  %346 = vrot.lane.b32.xlu0 %v342, 8
  %v347 = vpop.permute.xlu0 %346
  %v348 = vadd.f32 %v342, %v347
  %349 = vrot.lane.b32.xlu0 %v345, 8
  %v350 = vpop.permute.xlu0 %349
  %v351 = vadd.f32 %v345, %v350
  %352 = vrot.lane.b32.xlu0 %v348, 16
  %v353 = vpop.permute.xlu0 %352
  %v354 = vadd.f32 %v348, %v353
  %355 = vrot.lane.b32.xlu0 %v351, 16
  %v356 = vpop.permute.xlu0 %355
  %v357 = vadd.f32 %v351, %v356
  %358 = vrot.lane.b32.xlu0 %v354, 32
  %v359 = vpop.permute.xlu0 %358
  %v360 = vadd.f32 %v354, %v359
  %361 = vrot.lane.b32.xlu0 %v357, 32
  %v362 = vpop.permute.xlu0 %361
  %v363 = vadd.f32 %v357, %v362
  %364 = vrot.lane.b32.xlu0 %v360, 64
  %v365 = vpop.permute.xlu0 %364
  %v366 = vadd.f32 %v360, %v365
  %367 = vrot.lane.b32.xlu0 %v363, 64
  %v368 = vpop.permute.xlu0 %367
  %v369 = vadd.f32 %v363, %v368
  %v370 = vmul.f32 %v366, 0.001953125
  %v371 = vmul.f32 %v369, 0.001953125
  %v372 = vmul.f32 %v370, %v370
  %v373 = vsub.f32 %v371, %v372
  %v374 = vadd.f32 %v373, 1e-05
  %v375 = vrsqrt.pop %v374
  %v376 = vmul.f32 %v322, %v375
  %v378 = vlaneseq
  %v379 = vshrl.u32 %v378, 7
  %v380 = vsub.s32 0, %v379
  %v381 = vrot.slane %v376, %v380
  %v383 = vmul.f32 %v316, %v381
  %v384 = vmul.f32 %v319, %v381
  %v385 = vmul.f32 %v370, %v376
  %v386 = vsub.f32 %v323, %v385
  %v388 = vlaneseq
  %v389 = vshrl.u32 %v388, 7
  %v390 = vsub.s32 0, %v389
  %v391 = vrot.slane %v386, %v390
  %v393 = vadd.f32 %v383, %v391
  %v394 = vadd.f32 %v384, %v391
  %v395 = vmax.f32 %v393, 0.0
  %v396 = vmax.f32 %v394, 0.0
  %v399 = vrot.slane %v395, 7
  %v400 = vrot.slane %v396, 7
  %v401 = vsel %vm31, %v399, %v400
  %v404 = vsel %vm31, 0.0, %v399
  %v405 = vrot.slane %v395, 1
  %v406 = vrot.slane %v396, 1
  %v407 = vsel %vm38, %v405, %v406
  %v410 = vsel %vm38, %v406, 0.0
  %v411 = vpack.c.bf16 %v401, %v404
  %v412 = vpack.c.bf16 %v396, %v395
  %v413 = vpack.c.bf16 %v410, %v407
  %v414 = vld [vmem:[%s2] sm:$0xf]
  %v415 = vld [vmem:[%s2 + $0x4] sm:$0xf]
  %v416 = vld [vmem:[%s2 + $0x8] sm:$0xf]
  %v417 = vld [vmem:[%s2 + $0xc] sm:$0xf]
  %v418 = vld [vmem:[%s2 + $0x10] sm:$0xf]
  %v419 = vld [vmem:[%s2 + $0x14] sm:$0xf]
  %v420 = vld [vmem:[%s2 + $0x18] sm:$0xf]
  %v421 = vld [vmem:[%s2 + $0x1c] sm:$0xf]
  %v422 = vld [vmem:[%s2 + $0x20] sm:$0xf]
  %v423 = vld [vmem:[%s2 + $0x24] sm:$0xf]
  %v424 = vld [vmem:[%s2 + $0x28] sm:$0xf]
  %v425 = vld [vmem:[%s2 + $0x2c] sm:$0xf]
  %v426 = vld [vmem:[%s2 + $0x30] sm:$0xf]
  %v427 = vld [vmem:[%s2 + $0x34] sm:$0xf]
  %v428 = vld [vmem:[%s2 + $0x38] sm:$0xf]
  %v429 = vld [vmem:[%s2 + $0x3c] sm:$0xf]
  %v430 = vld [vmem:[%s2 + $0x40] sm:$0xf]
  %v431 = vld [vmem:[%s2 + $0x44] sm:$0xf]
  %v432 = vld [vmem:[%s2 + $0x48] sm:$0xf]
  %v433 = vld [vmem:[%s2 + $0x4c] sm:$0xf]
  %v434 = vld [vmem:[%s2 + $0x50] sm:$0xf]
  %v435 = vld [vmem:[%s2 + $0x54] sm:$0xf]
  %v436 = vld [vmem:[%s2 + $0x58] sm:$0xf]
  %v437 = vld [vmem:[%s2 + $0x5c] sm:$0xf]
  %v438 = vld [vmem:[%s2 + $0x60] sm:$0xf]
  %v439 = vld [vmem:[%s2 + $0x64] sm:$0xf]
  %v440 = vld [vmem:[%s2 + $0x68] sm:$0xf]
  %v441 = vld [vmem:[%s2 + $0x6c] sm:$0xf]
  %v442 = vld [vmem:[%s2 + $0x70] sm:$0xf]
  %v443 = vld [vmem:[%s2 + $0x74] sm:$0xf]
  %v444 = vld [vmem:[%s2 + $0x78] sm:$0xf]
  %v445 = vld [vmem:[%s2 + $0x7c] sm:$0xf]
  %v446 = vld [vmem:[%s2 + $0x80] sm:$0xf]
  %v447 = vld [vmem:[%s2 + $0x84] sm:$0xf]
  %v448 = vld [vmem:[%s2 + $0x88] sm:$0xf]
  %v449 = vld [vmem:[%s2 + $0x8c] sm:$0xf]
  %v450 = vld [vmem:[%s2 + $0x90] sm:$0xf]
  %v451 = vld [vmem:[%s2 + $0x94] sm:$0xf]
  %v452 = vld [vmem:[%s2 + $0x98] sm:$0xf]
  %v453 = vld [vmem:[%s2 + $0x9c] sm:$0xf]
  %v454 = vld [vmem:[%s2 + $0xa0] sm:$0xf]
  %v455 = vld [vmem:[%s2 + $0xa4] sm:$0xf]
  %v456 = vld [vmem:[%s2 + $0xa8] sm:$0xf]
  %v457 = vld [vmem:[%s2 + $0xac] sm:$0xf]
  %v458 = vld [vmem:[%s2 + $0xb0] sm:$0xf]
  %v459 = vld [vmem:[%s2 + $0xb4] sm:$0xf]
  %v460 = vld [vmem:[%s2 + $0xb8] sm:$0xf]
  %v461 = vld [vmem:[%s2 + $0xbc] sm:$0xf]
  %v510 = vunpack.c.l.b16 %v414
  %v511 = vunpack.c.l.b16 %v415
  %v512 = vunpack.c.l.b16 %v416
  %v513 = vunpack.c.l.b16 %v417
  %v514 = vunpack.c.l.b16 %v418
  %v515 = vunpack.c.l.b16 %v419
  %v516 = vunpack.c.l.b16 %v420
  %v517 = vunpack.c.l.b16 %v421
  %v518 = vunpack.c.l.b16 %v422
  %v519 = vunpack.c.l.b16 %v423
  %v520 = vunpack.c.l.b16 %v424
  %v521 = vunpack.c.l.b16 %v425
  %v522 = vunpack.c.l.b16 %v426
  %v523 = vunpack.c.l.b16 %v427
  %v524 = vunpack.c.l.b16 %v428
  %v525 = vunpack.c.l.b16 %v429
  %v526 = vunpack.c.l.b16 %v430
  %v527 = vunpack.c.l.b16 %v431
  %v528 = vunpack.c.l.b16 %v432
  %v529 = vunpack.c.l.b16 %v433
  %v530 = vunpack.c.l.b16 %v434
  %v531 = vunpack.c.l.b16 %v435
  %v532 = vunpack.c.l.b16 %v436
  %v533 = vunpack.c.l.b16 %v437
  %v534 = vunpack.c.l.b16 %v438
  %v535 = vunpack.c.l.b16 %v439
  %v536 = vunpack.c.l.b16 %v440
  %v537 = vunpack.c.l.b16 %v441
  %v538 = vunpack.c.l.b16 %v442
  %v539 = vunpack.c.l.b16 %v443
  %v540 = vunpack.c.l.b16 %v444
  %v541 = vunpack.c.l.b16 %v445
  %v542 = vunpack.c.l.b16 %v446
  %v543 = vunpack.c.l.b16 %v447
  %v544 = vunpack.c.l.b16 %v448
  %v545 = vunpack.c.l.b16 %v449
  %v546 = vunpack.c.l.b16 %v450
  %v547 = vunpack.c.l.b16 %v451
  %v548 = vunpack.c.l.b16 %v452
  %v549 = vunpack.c.l.b16 %v453
  %v550 = vunpack.c.l.b16 %v454
  %v551 = vunpack.c.l.b16 %v455
  %v552 = vunpack.c.l.b16 %v456
  %v553 = vunpack.c.l.b16 %v457
  %v554 = vunpack.c.l.b16 %v458
  %v555 = vunpack.c.l.b16 %v459
  %v556 = vunpack.c.l.b16 %v460
  %v557 = vunpack.c.l.b16 %v461
  %v558 = vpack.c.b16 %v511, %v510
  %v559 = vpack.c.b16 %v513, %v512
  %v560 = vpack.c.b16 %v515, %v514
  %v561 = vpack.c.b16 %v517, %v516
  %v562 = vpack.c.b16 %v519, %v518
  %v563 = vpack.c.b16 %v521, %v520
  %v564 = vpack.c.b16 %v523, %v522
  %v565 = vpack.c.b16 %v525, %v524
  %v566 = vpack.c.b16 %v527, %v526
  %v567 = vpack.c.b16 %v529, %v528
  %v568 = vpack.c.b16 %v531, %v530
  %v569 = vpack.c.b16 %v533, %v532
  %v570 = vpack.c.b16 %v535, %v534
  %v571 = vpack.c.b16 %v537, %v536
  %v572 = vpack.c.b16 %v539, %v538
  %v573 = vpack.c.b16 %v541, %v540
  %v574 = vpack.c.b16 %v543, %v542
  %v575 = vpack.c.b16 %v545, %v544
  %v576 = vpack.c.b16 %v547, %v546
  %v577 = vpack.c.b16 %v549, %v548
  %v578 = vpack.c.b16 %v551, %v550
  %v579 = vpack.c.b16 %v553, %v552
  %v580 = vpack.c.b16 %v555, %v554
  %v581 = vpack.c.b16 %v557, %v556
  %606 = vmatprep.subr.bf16.mxu0 0
  %607 = vmatpush1.bf16.msra.mxu0 %v558
  %608 = vmatprep.subr.bf16.mxu0 0
  %609 = vmatpush1.bf16.msra.mxu0 %v559
  %610 = vmatprep.subr.bf16.mxu0 0
  %611 = vmatpush1.bf16.msra.mxu0 %v560
  %612 = vmatprep.subr.bf16.mxu0 0
  %613 = vmatpush1.bf16.msra.mxu0 %v561
  %614 = vmatprep.subr.bf16.mxu0 0
  %615 = vmatpush1.bf16.msra.mxu0 %v562
  %616 = vmatprep.subr.bf16.mxu0 0
  %617 = vmatpush1.bf16.msra.mxu0 %v563
  %618 = vmatprep.subr.bf16.mxu0 0
  %619 = vmatpush1.bf16.msra.mxu0 %v564
  %620 = vmatprep.subr.bf16.mxu0 0
  %621 = vmatpush1.bf16.msra.mxu0 %v565
  %622 = vmatprep.subr.bf16.mxu0 0
  %623 = vmatpush1.bf16.msra.mxu0 %v566
  %624 = vmatprep.subr.bf16.mxu0 0
  %625 = vmatpush1.bf16.msra.mxu0 %v567
  %626 = vmatprep.subr.bf16.mxu0 0
  %627 = vmatpush1.bf16.msra.mxu0 %v568
  %628 = vmatprep.subr.bf16.mxu0 0
  %629 = vmatpush1.bf16.msra.mxu0 %v569
  %630 = vmatprep.subr.bf16.mxu0 0
  %631 = vmatpush1.bf16.msra.mxu0 %v570
  %632 = vmatprep.subr.bf16.mxu0 0
  %633 = vmatpush1.bf16.msra.mxu0 %v571
  %634 = vmatprep.subr.bf16.mxu0 0
  %635 = vmatpush1.bf16.msra.mxu0 %v572
  %636 = vmatprep.subr.bf16.mxu0 0
  %637 = vmatpush1.bf16.msra.mxu0 %v573
  %638 = vmatprep.mubr.bf16.mxu0 %v412
  %639 = vmatmul.mubr.bf16.gmra.mrb[0].mxu0 %v411
  %v640 = vpop.f32.mrb[0].mxu0
  %v641 = vadd.f32 0.0, %v640
  %v642 = vpop.f32.mrb[0].mxu0
  %v643 = vpop.f32.mrb[0].mxu0
  %v644 = vadd.f32 0.0, %v643
  %v645 = vpop.f32.mrb[0].mxu0
  %646 = vdwg.mxu0
  %647 = vmatprep.subr.bf16.mxu0 0
  %648 = vmatpush1.bf16.msra.mxu0 %v574
  %649 = vmatprep.subr.bf16.mxu0 0
  %650 = vmatpush1.bf16.msra.mxu0 %v575
  %651 = vmatprep.subr.bf16.mxu0 0
  %652 = vmatpush1.bf16.msra.mxu0 %v576
  %653 = vmatprep.subr.bf16.mxu0 0
  %654 = vmatpush1.bf16.msra.mxu0 %v577
  %655 = vmatprep.subr.bf16.mxu0 0
  %656 = vmatpush1.bf16.msra.mxu0 %v578
  %657 = vmatprep.subr.bf16.mxu0 0
  %658 = vmatpush1.bf16.msra.mxu0 %v579
  %659 = vmatprep.subr.bf16.mxu0 0
  %660 = vmatpush1.bf16.msra.mxu0 %v580
  %661 = vmatprep.subr.bf16.mxu0 0
  %662 = vmatpush1.bf16.msra.mxu0 %v581
  %663 = vmatprep.subr.bf16.mxu0 0
  %664 = vmatpush1.bf16.msra.mxu0 0
  %665 = vmatprep.subr.bf16.mxu0 0
  %666 = vmatpush1.bf16.msra.mxu0 0
  %667 = vmatprep.subr.bf16.mxu0 0
  %668 = vmatpush1.bf16.msra.mxu0 0
  %669 = vmatprep.subr.bf16.mxu0 0
  %670 = vmatpush1.bf16.msra.mxu0 0
  %671 = vmatprep.subr.bf16.mxu0 0
  %672 = vmatpush1.bf16.msra.mxu0 0
  %673 = vmatprep.subr.bf16.mxu0 0
  %674 = vmatpush1.bf16.msra.mxu0 0
  %675 = vmatprep.subr.bf16.mxu0 0
  %676 = vmatpush1.bf16.msra.mxu0 0
  %677 = vmatprep.subr.bf16.mxu0 0
  %678 = vmatpush1.bf16.msra.mxu0 0
  %679 = vmatprep.mubr.bf16.mxu0 0
  %680 = vmatmul.mubr.bf16.gmra.mrb[0].mxu0 %v413
  %v681 = vpop.f32.mrb[0].mxu0
  %v682 = vadd.f32 %v641, %v681
  %v683 = vpop.f32.mrb[0].mxu0
  %v684 = vpop.f32.mrb[0].mxu0
  %v685 = vadd.f32 %v644, %v684
  %v686 = vpop.f32.mrb[0].mxu0
  %687 = vdwg.mxu0
  %v688 = vld [vmem:[%s5] sm:$0x1]
  %v689 = vld [vmem:[%s6] sm:$0x1]
  %v690 = vadd.f32 %v682, %v685
  %v691 = vrot.slane %v690, 4
  %v692 = vadd.f32 %v690, %v691
  %v693 = vrot.slane %v692, 2
  %v694 = vadd.f32 %v692, %v693
  %v695 = vrot.slane %v694, 1
  %v696 = vadd.f32 %v694, %v695
  %v697 = vmul.f32 %v682, %v682
  %v698 = vmul.f32 %v685, %v685
  %v699 = vadd.f32 %v697, %v698
  %v700 = vrot.slane %v699, 4
  %v701 = vadd.f32 %v699, %v700
  %v702 = vrot.slane %v701, 2
  %v703 = vadd.f32 %v701, %v702
  %v704 = vrot.slane %v703, 1
  %v705 = vadd.f32 %v703, %v704
  %706 = vrot.lane.b32.xlu0 %v696, 4
  %v707 = vpop.permute.xlu0 %706
  %v708 = vadd.f32 %v696, %v707
  %709 = vrot.lane.b32.xlu0 %v705, 4
  %v710 = vpop.permute.xlu0 %709
  %v711 = vadd.f32 %v705, %v710
  %712 = vrot.lane.b32.xlu0 %v708, 8
  %v713 = vpop.permute.xlu0 %712
  %v714 = vadd.f32 %v708, %v713
  %715 = vrot.lane.b32.xlu0 %v711, 8
  %v716 = vpop.permute.xlu0 %715
  %v717 = vadd.f32 %v711, %v716
  %718 = vrot.lane.b32.xlu0 %v714, 16
  %v719 = vpop.permute.xlu0 %718
  %v720 = vadd.f32 %v714, %v719
  %721 = vrot.lane.b32.xlu0 %v717, 16
  %v722 = vpop.permute.xlu0 %721
  %v723 = vadd.f32 %v717, %v722
  %724 = vrot.lane.b32.xlu0 %v720, 32
  %v725 = vpop.permute.xlu0 %724
  %v726 = vadd.f32 %v720, %v725
  %727 = vrot.lane.b32.xlu0 %v723, 32
  %v728 = vpop.permute.xlu0 %727
  %v729 = vadd.f32 %v723, %v728
  %730 = vrot.lane.b32.xlu0 %v726, 64
  %v731 = vpop.permute.xlu0 %730
  %v732 = vadd.f32 %v726, %v731
  %733 = vrot.lane.b32.xlu0 %v729, 64
  %v734 = vpop.permute.xlu0 %733
  %v735 = vadd.f32 %v729, %v734
  %v736 = vmul.f32 %v732, 0.001953125
  %v737 = vmul.f32 %v735, 0.001953125
  %v738 = vmul.f32 %v736, %v736
  %v739 = vsub.f32 %v737, %v738
  %v740 = vadd.f32 %v739, 1e-05
  %v741 = vrsqrt.pop %v740
  %v742 = vmul.f32 %v688, %v741
  %v744 = vlaneseq
  %v745 = vshrl.u32 %v744, 7
  %v746 = vsub.s32 0, %v745
  %v747 = vrot.slane %v742, %v746
  %v749 = vmul.f32 %v682, %v747
  %v750 = vmul.f32 %v685, %v747
  %v751 = vmul.f32 %v736, %v742
  %v752 = vsub.f32 %v689, %v751
  %v754 = vlaneseq
  %v755 = vshrl.u32 %v754, 7
  %v756 = vsub.s32 0, %v755
  %v757 = vrot.slane %v752, %v756
  %v759 = vadd.f32 %v749, %v757
  %v760 = vadd.f32 %v750, %v757
  %v761 = vadd.f32 %v27, %v759
  %v762 = vadd.f32 %v28, %v760
  %763 = vst [vmem:[%s7] sm:$0xff] %v761
  %764 = vst [vmem:[%s7 + $0x8] sm:$0xff] %v762
  // Predicated region
  $region30: #{residual_block.1} parent=0 // pred_check
    _
  $region31: #{residual_block.1} parent=0 // pred_check_branch
    %766 = sbr.rel (0) target = $region33
  $region32: #{residual_block.1} parent=0 // pred_region
    _
  $region33: #{residual_block.1} parent=0 // pred_fallthru
    _
  // Predicated region
  $region34: #{residual_block.1} parent=0 // pred_check
    _
  $region35: #{residual_block.1} parent=0 // pred_check_branch
    %768 = sbr.rel (0) target = $region37
  $region36: #{residual_block.1} parent=0 // pred_region
    _
  $region37: #{residual_block.1} parent=0 // pred_fallthru
    _

</llo_original>
